<compile_context>
chip_gen: v7x
topology: tpu7x:2x2x1
jax: 0.10.0
libtpu: 0.0.40
codegen_flags: <defaults>
</compile_context>

<pallas_src>
import math
import jax
import jax.numpy as jnp
from jax.experimental import pallas as pl
from jax.experimental.pallas import tpu as pltpu


HEAD_OUT = 8  # fused head scores: col 0 = sentiment, col 1 = stability, rest pad


def _round_up(n, m):
    return ((n + m - 1) // m) * m


def amiloit_kernel(x_ref, wp_ref, bp_ref, gamma_ref, beta_ref,
                   wh_ref, bh_ref, stab_ref, scores_ref):
    # pruned = relu(x @ Wp + bp): matmul in native dtype, f32 accumulation.
    h = jnp.dot(x_ref[...], wp_ref[...], preferred_element_type=jnp.float32)
    h = jnp.maximum(h + bp_ref[...].astype(jnp.float32), 0.0)

    # dropout(p=0.1): identity in eval mode (deterministic forward).
    # TODO(synk): training-mode stochastic dropout mask not reproduced.

    # LayerNorm over last dim (biased variance, eps=1e-5, affine), f32 math.
    mu = jnp.mean(h, axis=-1, keepdims=True)
    d = h - mu
    var = jnp.mean(d * d, axis=-1, keepdims=True)
    inv = jax.lax.rsqrt(var + 1e-5)
    stab = (d * inv * gamma_ref[...].astype(jnp.float32)
            + beta_ref[...].astype(jnp.float32))
    stab_ref[...] = stab.astype(stab_ref.dtype)

    # Fused heads: (tile_n, D) @ (D, 8).  Column 0 -> tanh, column 1 -> sigmoid.
    # sigmoid(x) = 0.5 * (1 + tanh(x / 2)), so one tanh per element (8 lanes)
    # covers both heads via per-column scale/offset.
    scores = jnp.dot(stab.astype(wh_ref.dtype), wh_ref[...],
                     preferred_element_type=jnp.float32)
    scores = scores + bh_ref[...].astype(jnp.float32)
    col = jax.lax.broadcasted_iota(jnp.int32, scores.shape, 1)
    is_sig = col == 1
    scl = jnp.where(is_sig, 0.5, 1.0)
    off = jnp.where(is_sig, 0.5, 0.0)
    act = off + scl * jnp.tanh(scores * scl)
    scores_ref[...] = act.astype(scores_ref.dtype)


def _vmem_limit_bytes():
    cap = 128 * 1024 * 1024
    try:
        cap = int(pltpu.get_tpu_info().vmem_capacity_bytes)
    except Exception:
        pass
    # ~80% of physical VMEM, capped at 100 MiB: ~51 MiB on v7x (64 MiB phys),
    # 100 MiB on v5e/v6e (128 MiB phys) -- always above the scoped defaults.
    return int(min(cap * 0.8, 100 * 1024 * 1024))


def _choose_tile_n(N, D, dtype, vmem_limit):
    itm = jnp.dtype(dtype).itemsize
    mult = max(8, 32 // itm)          # sublane multiple: 8 f32, 16 bf16
    # Single-buffered resident weights + per-row double-buffered tiles & temps.
    weight_bytes = D * D * itm + D * HEAD_OUT * itm + 3 * D * 4 + HEAD_OUT * 4
    per_row = (2 * D * itm            # x tile (double buffered)
               + 2 * D * itm          # stab out tile (double buffered)
               + 2 * HEAD_OUT * 4     # scores out tile (double buffered, f32)
               + 4 * D * 4            # h / d / stab f32 temporaries headroom
               + 64)
    budget = int(vmem_limit * 0.75) - weight_bytes
    cap = max(mult, budget // per_row)
    cap = min(cap, 2048)              # diminishing returns past ~2k rows
    if N > mult:                      # keep >=2 grid steps (v7x has 2 TCs)
        cap = min(cap, _round_up(pl.cdiv(N, 2), mult))
    tile = min(cap, _round_up(N, mult))
    return max(mult, (tile // mult) * mult)


def amiloit_forward(x, params, *, tile_n=None):
    """x: (B, S, D). Returns (stabilized, sentiment_score, stability_score)."""
    B, S, D = x.shape
    N = B * S
    xf = x.reshape(N, D)

    vmem_limit = _vmem_limit_bytes()
    if tile_n is None:
        tile_n = _choose_tile_n(N, D, x.dtype, vmem_limit)
    grid = (pl.cdiv(N, tile_n),)      # ragged last block handled by Pallas

    wp = params["pruner_w"]           # (D, D), laid out so y = x @ wp
    bp = params["pruner_b"]           # (1, D)
    gamma = params["ln_gamma"]        # (1, D)
    beta = params["ln_beta"]          # (1, D)
    wh = jnp.pad(params["heads_w"], ((0, 0), (0, HEAD_OUT - 2)))  # (D, 8)
    bh = jnp.pad(params["heads_b"], ((0, 0), (0, HEAD_OUT - 2)))  # (1, 8)

    row_spec = pl.BlockSpec((tile_n, D), lambda i: (i, 0))
    resident = lambda shape: pl.BlockSpec(shape, lambda i: (0, 0),
                                          pipeline_mode=pl.Buffered(1))

    itm = jnp.dtype(x.dtype).itemsize
    witm = jnp.dtype(wp.dtype).itemsize
    bytes_io = (N * D * itm                 # x in
                + N * D * itm               # stab out
                + N * HEAD_OUT * 4          # scores out (8 lanes, f32)
                + D * D * witm + D * HEAD_OUT * witm
                + 3 * D * 4 + HEAD_OUT * 4)
    cost = pl.CostEstimate(
        flops=2 * N * D * D + 2 * N * D * HEAD_OUT + 10 * N * D,
        transcendentals=N * HEAD_OUT,
        bytes_accessed=int(bytes_io))

    stab, scores = pl.pallas_call(
        amiloit_kernel,
        grid=grid,
        in_specs=[
            row_spec,                       # x rows
            resident((D, D)),               # pruner weight (single-buffered)
            resident((1, D)),               # pruner bias
            resident((1, D)),               # ln gamma
            resident((1, D)),               # ln beta
            resident((D, HEAD_OUT)),        # fused head weights (padded to 8)
            resident((1, HEAD_OUT)),        # fused head biases
        ],
        out_specs=[
            pl.BlockSpec((tile_n, D), lambda i: (i, 0)),
            pl.BlockSpec((tile_n, HEAD_OUT), lambda i: (i, 0)),
        ],
        out_shape=[
            jax.ShapeDtypeStruct((N, D), x.dtype),
            jax.ShapeDtypeStruct((N, HEAD_OUT), jnp.float32),
        ],
        compiler_params=pltpu.CompilerParams(
            dimension_semantics=("parallel",),
            vmem_limit_bytes=vmem_limit),
        cost_estimate=cost,
    )(xf, wp, bp, gamma, beta, wh, bh)

    stabilized = stab.reshape(B, S, D)
    scores = scores.reshape(B, S, HEAD_OUT)
    sentiment = scores[..., 0:1]
    stability = scores[..., 1:2]
    return stabilized, sentiment, stability


def init_params(key, dim):
    """Deterministic init mirroring nn.Linear / nn.LayerNorm shapes."""
    k1, k2, k3, k4, k5, k6 = jax.random.split(key, 6)
    bound = 1.0 / math.sqrt(dim)
    pruner_w = jax.random.uniform(k1, (dim, dim), jnp.float32, -bound, bound)
    pruner_b = jax.random.uniform(k2, (1, dim), jnp.float32, -bound, bound)
    sent_w = jax.random.uniform(k3, (dim, 1), jnp.float32, -bound, bound)
    stab_w = jax.random.uniform(k4, (dim, 1), jnp.float32, -bound, bound)
    sent_b = jax.random.uniform(k5, (1, 1), jnp.float32, -bound, bound)
    stab_b = jax.random.uniform(k6, (1, 1), jnp.float32, -bound, bound)
    return {
        "pruner_w": pruner_w,
        "pruner_b": pruner_b,
        "ln_gamma": jnp.ones((1, dim), jnp.float32),
        "ln_beta": jnp.zeros((1, dim), jnp.float32),
        "heads_w": jnp.concatenate([sent_w, stab_w], axis=1),   # (dim, 2)
        "heads_b": jnp.concatenate([sent_b, stab_b], axis=1),   # (1, 2)
    }


def reference_forward(x, params):
    """Pure-JAX f32 reference (highest matmul precision) for correctness."""
    f32 = lambda a: jnp.asarray(a, jnp.float32)
    hi = jax.lax.Precision.HIGHEST
    xf = f32(x)
    h = jnp.maximum(
        jnp.dot(xf, f32(params["pruner_w"]), precision=hi)
        + f32(params["pruner_b"])[0], 0.0)
    mu = jnp.mean(h, axis=-1, keepdims=True)
    var = jnp.mean((h - mu) ** 2, axis=-1, keepdims=True)
    stab = ((h - mu) * jax.lax.rsqrt(var + 1e-5) * f32(params["ln_gamma"])[0]
            + f32(params["ln_beta"])[0])
    scores = (jnp.dot(stab, f32(params["heads_w"]), precision=hi)
              + f32(params["heads_b"])[0])
    return stab, jnp.tanh(scores[..., 0:1]), jax.nn.sigmoid(scores[..., 1:2])


def _check(x, params, atol, rtol):
    stab, sent, stable = amiloit_forward(x, params)
    jax.block_until_ready((stab, sent, stable))
    rstab, rsent, rstable = reference_forward(x, params)
    B, S, D = x.shape
    assert stab.shape == (B, S, D)
    assert sent.shape == (B, S, 1) and stable.shape == (B, S, 1)
    assert jnp.allclose(stab.astype(jnp.float32), rstab, atol=atol, rtol=rtol)
    assert jnp.allclose(sent.astype(jnp.float32), rsent, atol=atol, rtol=rtol)
    assert jnp.allclose(stable.astype(jnp.float32), rstable, atol=atol, rtol=rtol)


if __name__ == "__main__":
    key = jax.random.PRNGKey(0)
    kx, kp, kx2 = jax.random.split(key, 3)

    # Primary small example consistent with the module: (B, S, D) = (2, 8, 32).
    B, S, D = 2, 8, 32
    x = jax.random.normal(kx, (B, S, D), jnp.float32)
    params = init_params(kp, D)
    _check(x, params, atol=1e-4, rtol=1e-4)

    # Ragged row-count path (N not a multiple of the row tile).
    x2 = jax.random.normal(kx2, (3, 7, D), jnp.float32)
    _check(x2, params, atol=1e-4, rtol=1e-4)

    # Production-style bf16 streaming path (native-dtype MXU operands,
    # f32 accumulation); loose tolerance is a bf16 accuracy choice, not a bug.
    xb = x.astype(jnp.bfloat16)
    params_b = dict(params,
                    pruner_w=params["pruner_w"].astype(jnp.bfloat16),
                    heads_w=params["heads_w"].astype(jnp.bfloat16))
    _check(xb, params_b, atol=1e-1, rtol=1e-1)

    print("KERNEL_OK")
</pallas_src>

<mosaic_0001>
module attributes {stable_mosaic.version = 11 : i64} {
  func.func @amiloit_kernel(%arg0: i32, %arg1: memref<8x32xf32, #tpu.memory_space<vmem>>, %arg2: memref<32x32xf32, #tpu.memory_space<vmem>>, %arg3: memref<1x32xf32, #tpu.memory_space<vmem>>, %arg4: memref<1x32xf32, #tpu.memory_space<vmem>>, %arg5: memref<1x32xf32, #tpu.memory_space<vmem>>, %arg6: memref<32x8xf32, #tpu.memory_space<vmem>>, %arg7: memref<1x8xf32, #tpu.memory_space<vmem>>, %arg8: memref<8x32xf32, #tpu.memory_space<vmem>>, %arg9: memref<8x8xf32, #tpu.memory_space<vmem>>) attributes {dimension_semantics = [#tpu.dimension_semantics<parallel>], iteration_bounds = array<i64: 2>, scalar_prefetch = 0 : i64, scratch_operands = 0 : i64, tpu.core_type = #tpu.core_type<tc>, window_params = [{transform_indices = @transform_0, window_bounds = array<i64: 8, 32>}, {pipeline_mode = #tpu.pipeline_mode<synchronous>, transform_indices = @transform_1, window_bounds = array<i64: 32, 32>}, {pipeline_mode = #tpu.pipeline_mode<synchronous>, transform_indices = @transform_2, window_bounds = array<i64: 1, 32>}, {pipeline_mode = #tpu.pipeline_mode<synchronous>, transform_indices = @transform_3, window_bounds = array<i64: 1, 32>}, {pipeline_mode = #tpu.pipeline_mode<synchronous>, transform_indices = @transform_4, window_bounds = array<i64: 1, 32>}, {pipeline_mode = #tpu.pipeline_mode<synchronous>, transform_indices = @transform_5, window_bounds = array<i64: 32, 8>}, {pipeline_mode = #tpu.pipeline_mode<synchronous>, transform_indices = @transform_6, window_bounds = array<i64: 1, 8>}, {transform_indices = @transform_7, window_bounds = array<i64: 8, 32>}, {transform_indices = @transform_8, window_bounds = array<i64: 8, 8>}]} {
    %c0 = arith.constant 0 : index
    %c0_0 = arith.constant 0 : index
    %0 = vector.load %arg1[%c0, %c0_0] : memref<8x32xf32, #tpu.memory_space<vmem>>, vector<8x32xf32>
    %c0_1 = arith.constant 0 : index
    %c0_2 = arith.constant 0 : index
    %1 = vector.load %arg2[%c0_1, %c0_2] : memref<32x32xf32, #tpu.memory_space<vmem>>, vector<32x32xf32>
    %cst = arith.constant dense<0.000000e+00> : vector<8x32xf32>
    %2 = tpu.matmul %0, %1, %cst {dimension_numbers = #tpu.dot_dimension_numbers<[1], [0], [0], [1], [0, 0, 1, 1], [], []>} : vector<8x32xf32>, vector<32x32xf32>, vector<8x32xf32> -> vector<8x32xf32>
    %c0_3 = arith.constant 0 : index
    %c0_4 = arith.constant 0 : index
    %3 = vector.load %arg3[%c0_3, %c0_4] : memref<1x32xf32, #tpu.memory_space<vmem>>, vector<1x32xf32>
    %4 = vector.broadcast %3 : vector<1x32xf32> to vector<8x32xf32>
    %5 = arith.addf %2, %4 : vector<8x32xf32>
    %cst_5 = arith.constant 0.000000e+00 : f32
    %6 = vector.broadcast %cst_5 : f32 to vector<8x32xf32>
    %7 = arith.maximumf %5, %6 : vector<8x32xf32>
    %cst_6 = arith.constant dense<0.000000e+00> : vector<8xf32>
    %8 = vector.multi_reduction <add>, %7, %cst_6 [1] : vector<8x32xf32> to vector<8xf32>
    %9 = vector.shape_cast %8 : vector<8xf32> to vector<8x1xf32>
    %cst_7 = arith.constant 3.200000e+01 : f32
    %10 = vector.broadcast %cst_7 : f32 to vector<8x1xf32>
    %11 = arith.divf %9, %10 : vector<8x1xf32>
    %12 = vector.broadcast %11 : vector<8x1xf32> to vector<8x32xf32>
    %13 = arith.subf %7, %12 : vector<8x32xf32>
    %14 = arith.mulf %13, %13 : vector<8x32xf32>
    %cst_8 = arith.constant dense<0.000000e+00> : vector<8xf32>
    %15 = vector.multi_reduction <add>, %14, %cst_8 [1] : vector<8x32xf32> to vector<8xf32>
    %16 = vector.shape_cast %15 : vector<8xf32> to vector<8x1xf32>
    %cst_9 = arith.constant 3.200000e+01 : f32
    %17 = vector.broadcast %cst_9 : f32 to vector<8x1xf32>
    %18 = arith.divf %16, %17 : vector<8x1xf32>
    %cst_10 = arith.constant 9.99999974E-6 : f32
    %19 = vector.broadcast %cst_10 : f32 to vector<8x1xf32>
    %20 = arith.addf %18, %19 : vector<8x1xf32>
    %21 = math.rsqrt %20 : vector<8x1xf32>
    %22 = vector.broadcast %21 : vector<8x1xf32> to vector<8x32xf32>
    %23 = arith.mulf %13, %22 : vector<8x32xf32>
    %c0_11 = arith.constant 0 : index
    %c0_12 = arith.constant 0 : index
    %24 = vector.load %arg4[%c0_11, %c0_12] : memref<1x32xf32, #tpu.memory_space<vmem>>, vector<1x32xf32>
    %25 = vector.broadcast %24 : vector<1x32xf32> to vector<8x32xf32>
    %26 = arith.mulf %23, %25 : vector<8x32xf32>
    %c0_13 = arith.constant 0 : index
    %c0_14 = arith.constant 0 : index
    %27 = vector.load %arg5[%c0_13, %c0_14] : memref<1x32xf32, #tpu.memory_space<vmem>>, vector<1x32xf32>
    %28 = vector.broadcast %27 : vector<1x32xf32> to vector<8x32xf32>
    %29 = arith.addf %26, %28 : vector<8x32xf32>
    %c0_15 = arith.constant 0 : index
    %c0_16 = arith.constant 0 : index
    %30 = vector.load %arg8[%c0_15, %c0_16] : memref<8x32xf32, #tpu.memory_space<vmem>>, vector<8x32xf32>
    tpu.vector_store %arg8[%c0_15, %c0_16], %29 {strides = array<i32>} : memref<8x32xf32, #tpu.memory_space<vmem>>, vector<8x32xf32>,
    %c0_17 = arith.constant 0 : index
    %c0_18 = arith.constant 0 : index
    %31 = vector.load %arg6[%c0_17, %c0_18] : memref<32x8xf32, #tpu.memory_space<vmem>>, vector<32x8xf32>
    %cst_19 = arith.constant dense<0.000000e+00> : vector<8x8xf32>
    %32 = tpu.matmul %29, %31, %cst_19 {dimension_numbers = #tpu.dot_dimension_numbers<[1], [0], [0], [1], [0, 0, 1, 1], [], []>} : vector<8x32xf32>, vector<32x8xf32>, vector<8x8xf32> -> vector<8x8xf32>
    %c0_20 = arith.constant 0 : index
    %c0_21 = arith.constant 0 : index
    %33 = vector.load %arg7[%c0_20, %c0_21] : memref<1x8xf32, #tpu.memory_space<vmem>>, vector<1x8xf32>
    %34 = vector.broadcast %33 : vector<1x8xf32> to vector<8x8xf32>
    %35 = arith.addf %32, %34 : vector<8x8xf32>
    %36 = tpu.iota {dimensions = array<i32: 1>} : vector<8x8xi32>
    %c1_i32 = arith.constant 1 : i32
    %37 = vector.broadcast %c1_i32 : i32 to vector<8x8xi32>
    %38 = arith.cmpi eq, %36, %37 : vector<8x8xi32>
    %cst_22 = arith.constant 5.000000e-01 : f32
    %cst_23 = arith.constant 1.000000e+00 : f32
    %39 = vector.broadcast %cst_22 : f32 to vector<8x8xf32>
    %40 = vector.broadcast %cst_23 : f32 to vector<8x8xf32>
    %41 = arith.select %38, %39, %40 : vector<8x8xi1>, vector<8x8xf32>
    %cst_24 = arith.constant 5.000000e-01 : f32
    %cst_25 = arith.constant 0.000000e+00 : f32
    %42 = vector.broadcast %cst_24 : f32 to vector<8x8xf32>
    %43 = vector.broadcast %cst_25 : f32 to vector<8x8xf32>
    %44 = arith.select %38, %42, %43 : vector<8x8xi1>, vector<8x8xf32>
    %45 = arith.mulf %35, %41 : vector<8x8xf32>
    %46 = math.tanh %45 : vector<8x8xf32>
    %47 = arith.mulf %41, %46 : vector<8x8xf32>
    %48 = arith.addf %44, %47 : vector<8x8xf32>
    %c0_26 = arith.constant 0 : index
    %c0_27 = arith.constant 0 : index
    %49 = vector.load %arg9[%c0_26, %c0_27] : memref<8x8xf32, #tpu.memory_space<vmem>>, vector<8x8xf32>
    tpu.vector_store %arg9[%c0_26, %c0_27], %48 {strides = array<i32>} : memref<8x8xf32, #tpu.memory_space<vmem>>, vector<8x8xf32>,
    return
  }
  func.func @transform_0(%arg0: i32) -> (i32, i32) {
    %c0_i32 = arith.constant 0 : i32
    %c0_i32_0 = arith.constant 0 : i32
    return %arg0, %c0_i32 : i32, i32
  }
  func.func @transform_1(%arg0: i32) -> (i32, i32) {
    %c0_i32 = arith.constant 0 : i32
    %c0_i32_0 = arith.constant 0 : i32
    %c0_i32_1 = arith.constant 0 : i32
    return %c0_i32, %c0_i32_0 : i32, i32
  }
  func.func @transform_2(%arg0: i32) -> (i32, i32) {
    %c0_i32 = arith.constant 0 : i32
    %c0_i32_0 = arith.constant 0 : i32
    %c0_i32_1 = arith.constant 0 : i32
    return %c0_i32, %c0_i32_0 : i32, i32
  }
  func.func @transform_3(%arg0: i32) -> (i32, i32) {
    %c0_i32 = arith.constant 0 : i32
    %c0_i32_0 = arith.constant 0 : i32
    %c0_i32_1 = arith.constant 0 : i32
    return %c0_i32, %c0_i32_0 : i32, i32
  }
  func.func @transform_4(%arg0: i32) -> (i32, i32) {
    %c0_i32 = arith.constant 0 : i32
    %c0_i32_0 = arith.constant 0 : i32
    %c0_i32_1 = arith.constant 0 : i32
    return %c0_i32, %c0_i32_0 : i32, i32
  }
  func.func @transform_5(%arg0: i32) -> (i32, i32) {
    %c0_i32 = arith.constant 0 : i32
    %c0_i32_0 = arith.constant 0 : i32
    %c0_i32_1 = arith.constant 0 : i32
    return %c0_i32, %c0_i32_0 : i32, i32
  }
  func.func @transform_6(%arg0: i32) -> (i32, i32) {
    %c0_i32 = arith.constant 0 : i32
    %c0_i32_0 = arith.constant 0 : i32
    %c0_i32_1 = arith.constant 0 : i32
    return %c0_i32, %c0_i32_0 : i32, i32
  }
  func.func @transform_7(%arg0: i32) -> (i32, i32) {
    %c0_i32 = arith.constant 0 : i32
    %c0_i32_0 = arith.constant 0 : i32
    return %arg0, %c0_i32 : i32, i32
  }
  func.func @transform_8(%arg0: i32) -> (i32, i32) {
    %c0_i32 = arith.constant 0 : i32
    %c0_i32_0 = arith.constant 0 : i32
    return %arg0, %c0_i32 : i32, i32
  }
}

</mosaic_0001>

<llo_original>
// kernel: tpu_custom_call.1
$region0: #{tpu_custom_call.1}
  #allocation0 [shape = 'u32[]', space=smem, size = 0x4, offset = 0x4, fixed_abs, tag = 'smem constant byte address 0x4 - core index']
  #allocation1 [shape = 'u32[144,128]{1,0:T(1,128)}', space=vmem, size = 0x12000, scoped, tag = 'internal scratch']
  %s0 = inlined_call_operand.hbm [shape: f32[16,32], index: 0, kind: input, shape index: {}]
  %s1 = inlined_call_operand.hbm [shape: f32[32,32], index: 1, kind: input, shape index: {}]
  %s2 = inlined_call_operand.hbm [shape: f32[1,32], index: 2, kind: input, shape index: {}]
  %s3 = inlined_call_operand.hbm [shape: f32[1,32], index: 3, kind: input, shape index: {}]
  %s4 = inlined_call_operand.hbm [shape: f32[1,32], index: 4, kind: input, shape index: {}]
  %s5 = inlined_call_operand.hbm [shape: f32[32,8], index: 5, kind: input, shape index: {}]
  %s6 = inlined_call_operand.hbm [shape: f32[1,8], index: 6, kind: input, shape index: {}]
  %s7 = inlined_call_operand.hbm [shape: f32[16,32], index: 7, kind: output, shape index: {0}]
  %s8 = inlined_call_operand.hbm [shape: f32[16,8], index: 8, kind: output, shape index: {1}]
  %9 = xla_tuple %s7, %s8
  %s10 = sld [smem:[#allocation0]]
  $region97: #{tpu_custom_call.1} parent=0
    _
  %s12 = ssub.s32 1, %s10
  %s13 = scalar_select 0, %s12, %s10
  $region1: #{tpu_custom_call.1} parent=0
    #allocation2 [shape = 'u8[8192]{0}', space=vmem, size = 0x2000, scoped, tag = 'input window, operand 0']
    #allocation3 [shape = 's32[2]{0}', space=sflag, size = 0x8, scoped, tag = 'scoped memory for tpu_custom_call.1']
    #allocation4 [shape = 's32[2]{0}', space=sflag, size = 0x8, scoped, tag = 'scoped memory for tpu_custom_call.1']
    #allocation5 [shape = 'u8[16384]{0}', space=vmem, size = 0x4000, scoped, tag = 'input window, operand 1, single buffered']
    #allocation6 [shape = 's32[1]{0}', space=sflag, size = 0x4, scoped, tag = 'scoped memory for tpu_custom_call.1']
    #allocation7 [shape = 'u8[512]{0}', space=vmem, size = 0x400, scoped, tag = 'input window, operand 2, single buffered']
    #allocation8 [shape = 'u8[512]{0}', space=vmem, size = 0x400, scoped, tag = 'input window, operand 3, single buffered']
    #allocation9 [shape = 's32[1]{0}', space=sflag, size = 0x4, scoped, tag = 'scoped memory for tpu_custom_call.1']
    #allocation10 [shape = 'u8[512]{0}', space=vmem, size = 0x400, scoped, tag = 'input window, operand 4, single buffered']
    #allocation11 [shape = 'u8[16384]{0}', space=vmem, size = 0x4000, scoped, tag = 'input window, operand 5, single buffered']
    #allocation12 [shape = 's32[1]{0}', space=sflag, size = 0x4, scoped, tag = 'scoped memory for tpu_custom_call.1']
    #allocation13 [shape = 'u8[512]{0}', space=vmem, size = 0x400, scoped, tag = 'input window, operand 6, single buffered']
    #allocation14 [shape = 'u8[8192]{0}', space=vmem, size = 0x2000, scoped, tag = 'output window, operand 0']
    #allocation15 [shape = 'u8[8192]{0}', space=vmem, size = 0x2000, scoped, tag = 'output window, operand 1']
    #allocation16 [shape = 's32[2]{0}', space=sflag, size = 0x8, scoped, tag = 'scoped memory for tpu_custom_call.1']
    %14 = vsyncpa [#allocation3], 0
    %s15 = scalar_lea.sflag [#allocation3], 1
    %16 = vsyncpa %s15, 0
    %17 = vsyncpa [#allocation6], 0
    %18 = vsyncpa [#allocation9], 0
    %19 = vsyncpa [#allocation12], 0
    %20 = vsyncpa [#allocation4], 0
    %s21 = scalar_lea.sflag [#allocation4], 1
    %22 = vsyncpa %s21, 0
    %23 = vsyncpa [#allocation16], 0
    %s24 = scalar_lea.sflag [#allocation16], 1
    %25 = vsyncpa %s24, 0
    loop: start=0, step=1, limit=4
    $region2: #{tpu_custom_call.1} parent=1 // loop_pre_header
      _
    $region3: #{tpu_custom_call.1} parent=1 // loop_header
      %s27 = sphi 0, %s31
      %p28 = scmp.ge.s32.totalorder %s27, 4
      %s37 = sphi 0, %s39
      %s40 = sphi 0, %s37
      %s41 = sphi 0, %s40
      %s57 = sphi 0, %s41
      %s61 = sphi 0, %s61
      %s63 = sphi 0, %s61
      %s64 = sphi 0, %s63
      %s78 = sphi 0, %s64
      %s82 = sphi 0, %s82
      %s84 = sphi 0, %s82
      %s85 = sphi 0, %s84
      %s99 = sphi 0, %s85
      %s103 = sphi 0, %s103
      %s105 = sphi 0, %s103
      %s106 = sphi 0, %s105
      %s120 = sphi 0, %s106
      %s124 = sphi 0, %s124
      %s126 = sphi 0, %s124
      %s127 = sphi 0, %s126
      %s141 = sphi 0, %s127
      %s145 = sphi 0, %s145
      %s147 = sphi 0, %s145
      %s148 = sphi 0, %s147
      %s162 = sphi 0, %s148
      %s166 = sphi 0, %s166
      %s168 = sphi 0, %s166
      %s169 = sphi 0, %s168
      %s183 = sphi 0, %s169
      %s189 = sphi 0, %s191
      %s192 = sphi 0, %s189
      %s193 = sphi 0, %s192
      %s209 = sphi 0, %s193
      %s215 = sphi 0, %s217
      %s218 = sphi 0, %s215
      %s219 = sphi 0, %s218
      %s235 = sphi 0, %s219
    $region4: #{tpu_custom_call.1} parent=1 // loop_header_branch
      %30 = sbr.rel (%p28) target = $region8
    $region5: #{tpu_custom_call.1} parent=1 // loop_body
      %s32 = ssub.s32 %s27, 1
      %s33 = ssub.s32 %s27, 2
      %s34 = sadd.s32 %s27, 1
      %s35 = ssub.s32 %s27, %s34
      %p36 = scmp.eq.s32.totalorder %s35, 0
      %s38 = sadd.s32 %s37, 1
      %s39 = scalar_select %p36, %s37, %s38
      %p42 = pneg %p36
      %p43 = scmp.eq.s32.totalorder %s27, 1
      %p44 = por %p42, %p43
      %p45 = scmp.ne.s32.totalorder %s37, %s40
      %p46 = scmp.eq.s32.totalorder %s27, 0
      %p47 = por %p45, %p46
      %p48 = scmp.ne.s32.totalorder %s37, %s40
      %p49 = scmp.eq.s32.totalorder %s32, 1
      %p50 = por %p48, %p49
      %p51 = scmp.ne.s32.totalorder %s40, %s41
      %p52 = scmp.eq.s32.totalorder %s32, 0
      %p53 = por %p51, %p52
      %p54 = scmp.ne.s32.totalorder %s40, %s41
      %p55 = scmp.eq.s32.totalorder %s33, 1
      %p56 = por %p54, %p55
      %p58 = scmp.ne.s32.totalorder %s41, %s57
      %p59 = scmp.eq.s32.totalorder %s33, 0
      %p60 = por %p58, %p59
      %s62 = sadd.s32 %s61, 1
      %p65 = scmp.eq.s32.totalorder %s27, 1
      %p66 = scmp.ne.s32.totalorder %s61, %s63
      %p67 = scmp.eq.s32.totalorder %s27, 0
      %p68 = por %p66, %p67
      %p69 = scmp.ne.s32.totalorder %s61, %s63
      %p70 = scmp.eq.s32.totalorder %s32, 1
      %p71 = por %p69, %p70
      %p72 = scmp.ne.s32.totalorder %s63, %s64
      %p73 = scmp.eq.s32.totalorder %s32, 0
      %p74 = por %p72, %p73
      %p75 = scmp.ne.s32.totalorder %s63, %s64
      %p76 = scmp.eq.s32.totalorder %s33, 1
      %p77 = por %p75, %p76
      %p79 = scmp.ne.s32.totalorder %s64, %s78
      %p80 = scmp.eq.s32.totalorder %s33, 0
      %p81 = por %p79, %p80
      %s83 = sadd.s32 %s82, 1
      %p86 = scmp.eq.s32.totalorder %s27, 1
      %p87 = scmp.ne.s32.totalorder %s82, %s84
      %p88 = scmp.eq.s32.totalorder %s27, 0
      %p89 = por %p87, %p88
      %p90 = scmp.ne.s32.totalorder %s82, %s84
      %p91 = scmp.eq.s32.totalorder %s32, 1
      %p92 = por %p90, %p91
      %p93 = scmp.ne.s32.totalorder %s84, %s85
      %p94 = scmp.eq.s32.totalorder %s32, 0
      %p95 = por %p93, %p94
      %p96 = scmp.ne.s32.totalorder %s84, %s85
      %p97 = scmp.eq.s32.totalorder %s33, 1
      %p98 = por %p96, %p97
      %p100 = scmp.ne.s32.totalorder %s85, %s99
      %p101 = scmp.eq.s32.totalorder %s33, 0
      %p102 = por %p100, %p101
      %s104 = sadd.s32 %s103, 1
      %p107 = scmp.eq.s32.totalorder %s27, 1
      %p108 = scmp.ne.s32.totalorder %s103, %s105
      %p109 = scmp.eq.s32.totalorder %s27, 0
      %p110 = por %p108, %p109
      %p111 = scmp.ne.s32.totalorder %s103, %s105
      %p112 = scmp.eq.s32.totalorder %s32, 1
      %p113 = por %p111, %p112
      %p114 = scmp.ne.s32.totalorder %s105, %s106
      %p115 = scmp.eq.s32.totalorder %s32, 0
      %p116 = por %p114, %p115
      %p117 = scmp.ne.s32.totalorder %s105, %s106
      %p118 = scmp.eq.s32.totalorder %s33, 1
      %p119 = por %p117, %p118
      %p121 = scmp.ne.s32.totalorder %s106, %s120
      %p122 = scmp.eq.s32.totalorder %s33, 0
      %p123 = por %p121, %p122
      %s125 = sadd.s32 %s124, 1
      %p128 = scmp.eq.s32.totalorder %s27, 1
      %p129 = scmp.ne.s32.totalorder %s124, %s126
      %p130 = scmp.eq.s32.totalorder %s27, 0
      %p131 = por %p129, %p130
      %p132 = scmp.ne.s32.totalorder %s124, %s126
      %p133 = scmp.eq.s32.totalorder %s32, 1
      %p134 = por %p132, %p133
      %p135 = scmp.ne.s32.totalorder %s126, %s127
      %p136 = scmp.eq.s32.totalorder %s32, 0
      %p137 = por %p135, %p136
      %p138 = scmp.ne.s32.totalorder %s126, %s127
      %p139 = scmp.eq.s32.totalorder %s33, 1
      %p140 = por %p138, %p139
      %p142 = scmp.ne.s32.totalorder %s127, %s141
      %p143 = scmp.eq.s32.totalorder %s33, 0
      %p144 = por %p142, %p143
      %s146 = sadd.s32 %s145, 1
      %p149 = scmp.eq.s32.totalorder %s27, 1
      %p150 = scmp.ne.s32.totalorder %s145, %s147
      %p151 = scmp.eq.s32.totalorder %s27, 0
      %p152 = por %p150, %p151
      %p153 = scmp.ne.s32.totalorder %s145, %s147
      %p154 = scmp.eq.s32.totalorder %s32, 1
      %p155 = por %p153, %p154
      %p156 = scmp.ne.s32.totalorder %s147, %s148
      %p157 = scmp.eq.s32.totalorder %s32, 0
      %p158 = por %p156, %p157
      %p159 = scmp.ne.s32.totalorder %s147, %s148
      %p160 = scmp.eq.s32.totalorder %s33, 1
      %p161 = por %p159, %p160
      %p163 = scmp.ne.s32.totalorder %s148, %s162
      %p164 = scmp.eq.s32.totalorder %s33, 0
      %p165 = por %p163, %p164
      %s167 = sadd.s32 %s166, 1
      %p170 = scmp.eq.s32.totalorder %s27, 1
      %p171 = scmp.ne.s32.totalorder %s166, %s168
      %p172 = scmp.eq.s32.totalorder %s27, 0
      %p173 = por %p171, %p172
      %p174 = scmp.ne.s32.totalorder %s166, %s168
      %p175 = scmp.eq.s32.totalorder %s32, 1
      %p176 = por %p174, %p175
      %p177 = scmp.ne.s32.totalorder %s168, %s169
      %p178 = scmp.eq.s32.totalorder %s32, 0
      %p179 = por %p177, %p178
      %p180 = scmp.ne.s32.totalorder %s168, %s169
      %p181 = scmp.eq.s32.totalorder %s33, 1
      %p182 = por %p180, %p181
      %p184 = scmp.ne.s32.totalorder %s169, %s183
      %p185 = scmp.eq.s32.totalorder %s33, 0
      %p186 = por %p184, %p185
      %s187 = ssub.s32 %s27, %s34
      %p188 = scmp.eq.s32.totalorder %s187, 0
      %s190 = sadd.s32 %s189, 1
      %s191 = scalar_select %p188, %s189, %s190
      %p194 = pneg %p188
      %p195 = scmp.eq.s32.totalorder %s27, 1
      %p196 = por %p194, %p195
      %p197 = scmp.ne.s32.totalorder %s189, %s192
      %p198 = scmp.eq.s32.totalorder %s27, 0
      %p199 = por %p197, %p198
      %p200 = scmp.ne.s32.totalorder %s189, %s192
      %p201 = scmp.eq.s32.totalorder %s32, 1
      %p202 = por %p200, %p201
      %p203 = scmp.ne.s32.totalorder %s192, %s193
      %p204 = scmp.eq.s32.totalorder %s32, 0
      %p205 = por %p203, %p204
      %p206 = scmp.ne.s32.totalorder %s192, %s193
      %p207 = scmp.eq.s32.totalorder %s33, 1
      %p208 = por %p206, %p207
      %p210 = scmp.ne.s32.totalorder %s193, %s209
      %p211 = scmp.eq.s32.totalorder %s33, 0
      %p212 = por %p210, %p211
      %s213 = ssub.s32 %s27, %s34
      %p214 = scmp.eq.s32.totalorder %s213, 0
      %s216 = sadd.s32 %s215, 1
      %s217 = scalar_select %p214, %s215, %s216
      %p220 = pneg %p214
      %p221 = scmp.eq.s32.totalorder %s27, 1
      %p222 = por %p220, %p221
      %p223 = scmp.ne.s32.totalorder %s215, %s218
      %p224 = scmp.eq.s32.totalorder %s27, 0
      %p225 = por %p223, %p224
      %p226 = scmp.ne.s32.totalorder %s215, %s218
      %p227 = scmp.eq.s32.totalorder %s32, 1
      %p228 = por %p226, %p227
      %p229 = scmp.ne.s32.totalorder %s218, %s219
      %p230 = scmp.eq.s32.totalorder %s32, 0
      %p231 = por %p229, %p230
      %p232 = scmp.ne.s32.totalorder %s218, %s219
      %p233 = scmp.eq.s32.totalorder %s33, 1
      %p234 = por %p232, %p233
      %p236 = scmp.ne.s32.totalorder %s219, %s235
      %p237 = scmp.eq.s32.totalorder %s33, 0
      %p238 = por %p236, %p237
      %p239 = scmp.le.s32.totalorder 1, %s27
      %p240 = scmp.lt.s32.totalorder %s27, 3
      %p241 = pnand %p239, %p240
      %p242 = pneg %p241
      // Predicated region
      $region9: #{tpu_custom_call.1} parent=5 // pred_check
        _
      $region10: #{tpu_custom_call.1} parent=5 // pred_check_branch
        %244 = sbr.rel (%p241) target = $region12
      $region11: #{tpu_custom_call.1} parent=5 // pred_region
        %s245 = ssub.s32 %s27, 1
        // Predicated region
        $region13: #{tpu_custom_call.1} parent=11 // pred_check
          %p246 = pneg %p74
        $region14: #{tpu_custom_call.1} parent=11 // pred_check_branch
          %248 = sbr.rel (%p246) target = $region16
        $region15: #{tpu_custom_call.1} parent=11 // pred_region
          %s250 = ssub.s32 512, 512
          %251 = vsyncadd [#allocation6], %s250
          %s252 = sshll.u32 [#allocation5], 4
          %s253 = int_to_ptr.vmem [resolvable:$true] %s252
          %258 = dma.hbm_to_vmem [thread:$0]  %s1, 512, %s253, [#allocation6], 128, 128, 8
        $region16: #{tpu_custom_call.1} parent=11 // pred_fallthru
          _
        // Predicated region
        $region17: #{tpu_custom_call.1} parent=11 // pred_check
          %p259 = pneg %p95
        $region18: #{tpu_custom_call.1} parent=11 // pred_check_branch
          %261 = sbr.rel (%p259) target = $region20
        $region19: #{tpu_custom_call.1} parent=11 // pred_region
          %s263 = ssub.s32 16, 16
          %264 = vsyncadd [#allocation6], %s263
          %s266 = sshll.u32 [#allocation7], 4
          %s267 = int_to_ptr.vmem [resolvable:$true] %s266
          %269 = dma.hbm_to_vmem [thread:$0]  %s2, 16, %s267, [#allocation6]
        $region20: #{tpu_custom_call.1} parent=11 // pred_fallthru
          _
        // Predicated region
        $region21: #{tpu_custom_call.1} parent=11 // pred_check
          %p270 = pneg %p116
        $region22: #{tpu_custom_call.1} parent=11 // pred_check_branch
          %272 = sbr.rel (%p270) target = $region24
        $region23: #{tpu_custom_call.1} parent=11 // pred_region
          %s274 = ssub.s32 16, 16
          %275 = vsyncadd [#allocation9], %s274
          %s277 = sshll.u32 [#allocation8], 4
          %s278 = int_to_ptr.vmem [resolvable:$true] %s277
          %280 = dma.hbm_to_vmem [thread:$0]  %s3, 16, %s278, [#allocation9]
        $region24: #{tpu_custom_call.1} parent=11 // pred_fallthru
          _
        // Predicated region
        $region25: #{tpu_custom_call.1} parent=11 // pred_check
          %p281 = pneg %p137
        $region26: #{tpu_custom_call.1} parent=11 // pred_check_branch
          %283 = sbr.rel (%p281) target = $region28
        $region27: #{tpu_custom_call.1} parent=11 // pred_region
          %s285 = ssub.s32 16, 16
          %286 = vsyncadd [#allocation9], %s285
          %s288 = sshll.u32 [#allocation10], 4
          %s289 = int_to_ptr.vmem [resolvable:$true] %s288
          %291 = dma.hbm_to_vmem [thread:$0]  %s4, 16, %s289, [#allocation9]
        $region28: #{tpu_custom_call.1} parent=11 // pred_fallthru
          _
        // Predicated region
        $region29: #{tpu_custom_call.1} parent=11 // pred_check
          %p292 = pneg %p158
        $region30: #{tpu_custom_call.1} parent=11 // pred_check_branch
          %294 = sbr.rel (%p292) target = $region32
        $region31: #{tpu_custom_call.1} parent=11 // pred_region
          %s296 = ssub.s32 512, 512
          %297 = vsyncadd [#allocation12], %s296
          %s298 = sshll.u32 [#allocation11], 4
          %s299 = int_to_ptr.vmem [resolvable:$true] %s298
          %304 = dma.hbm_to_vmem [thread:$0]  %s5, 512, %s299, [#allocation12], 128, 128, 8
        $region32: #{tpu_custom_call.1} parent=11 // pred_fallthru
          _
        // Predicated region
        $region33: #{tpu_custom_call.1} parent=11 // pred_check
          %p305 = pneg %p179
        $region34: #{tpu_custom_call.1} parent=11 // pred_check_branch
          %307 = sbr.rel (%p305) target = $region36
        $region35: #{tpu_custom_call.1} parent=11 // pred_region
          %s309 = ssub.s32 16, 16
          %310 = vsyncadd [#allocation12], %s309
          %s312 = sshll.u32 [#allocation13], 4
          %s313 = int_to_ptr.vmem [resolvable:$true] %s312
          %315 = dma.hbm_to_vmem [thread:$0]  %s6, 16, %s313, [#allocation12]
        $region36: #{tpu_custom_call.1} parent=11 // pred_fallthru
          _
      $region12: #{tpu_custom_call.1} parent=5 // pred_fallthru
        _
      %p316 = scmp.lt.s32.totalorder %s27, 2
      // Predicated region
      $region37: #{tpu_custom_call.1} parent=5 // pred_check
        %p317 = pneg %p316
      $region38: #{tpu_custom_call.1} parent=5 // pred_check_branch
        %319 = sbr.rel (%p317) target = $region40
      $region39: #{tpu_custom_call.1} parent=5 // pred_region
        // Predicated region
        $region41: #{tpu_custom_call.1} parent=39 // pred_check
          %p320 = pneg %p47
        $region42: #{tpu_custom_call.1} parent=39 // pred_check_branch
          %322 = sbr.rel (%p320) target = $region44
        $region43: #{tpu_custom_call.1} parent=39 // pred_region
          %s323 = sand.u32 %s37, 1
          %s324 = scalar_lea.sflag [#allocation3], %s323
          %s325 = sand.u32 %s37, 1
          %s326 = smul.addr %s325, 8
          %s327 = scalar_lea.vmem [#allocation2], %s326
          %s329 = ssub.s32 128, 128
          %330 = vsyncadd %s324, %s329
          %s331 = smul.addr %s27, 128
          %s332 = scalar_lea.hbm %s0, %s331
          %s334 = sshll.u32 %s327, 4
          %s335 = int_to_ptr.vmem [resolvable:$true] %s334
          %337 = dma.hbm_to_vmem [thread:$0]  %s332, 128, %s335, %s324
        $region44: #{tpu_custom_call.1} parent=39 // pred_fallthru
          _
      $region40: #{tpu_custom_call.1} parent=5 // pred_fallthru
        _
      %p338 = scmp.le.s32.totalorder 1, %s27
      %p339 = scmp.lt.s32.totalorder %s27, 3
      %p340 = pnand %p338, %p339
      %p341 = pneg %p340
      // Predicated region
      $region45: #{tpu_custom_call.1} parent=5 // pred_check
        _
      $region46: #{tpu_custom_call.1} parent=5 // pred_check_branch
        %343 = sbr.rel (%p340) target = $region48
      $region47: #{tpu_custom_call.1} parent=5 // pred_region
        %s344 = ssub.s32 %s27, 1
        %s345 = sand.u32 %s40, 1
        %s346 = scalar_lea.sflag [#allocation3], %s345
        %s347 = sand.u32 %s40, 1
        %s348 = smul.addr %s347, 8
        %s349 = scalar_lea.vmem [#allocation2], %s348
        // Predicated region
        $region49: #{tpu_custom_call.1} parent=47 // pred_check
          %p350 = pneg %p53
        $region50: #{tpu_custom_call.1} parent=47 // pred_check_branch
          %352 = sbr.rel (%p350) target = $region52
        $region51: #{tpu_custom_call.1} parent=47 // pred_region
          %353 = dma.done %s346, 128
        $region52: #{tpu_custom_call.1} parent=47 // pred_fallthru
          _
        // Predicated region
        $region53: #{tpu_custom_call.1} parent=47 // pred_check
          %p354 = pneg %p74
        $region54: #{tpu_custom_call.1} parent=47 // pred_check_branch
          %356 = sbr.rel (%p354) target = $region56
        $region55: #{tpu_custom_call.1} parent=47 // pred_region
          %357 = dma.done [#allocation6], 512
        $region56: #{tpu_custom_call.1} parent=47 // pred_fallthru
          _
        // Predicated region
        $region57: #{tpu_custom_call.1} parent=47 // pred_check
          %p358 = pneg %p95
        $region58: #{tpu_custom_call.1} parent=47 // pred_check_branch
          %360 = sbr.rel (%p358) target = $region60
        $region59: #{tpu_custom_call.1} parent=47 // pred_region
          %361 = dma.done [#allocation6], 16
        $region60: #{tpu_custom_call.1} parent=47 // pred_fallthru
          _
        // Predicated region
        $region61: #{tpu_custom_call.1} parent=47 // pred_check
          %p362 = pneg %p116
        $region62: #{tpu_custom_call.1} parent=47 // pred_check_branch
          %364 = sbr.rel (%p362) target = $region64
        $region63: #{tpu_custom_call.1} parent=47 // pred_region
          %365 = dma.done [#allocation9], 16
        $region64: #{tpu_custom_call.1} parent=47 // pred_fallthru
          _
        // Predicated region
        $region65: #{tpu_custom_call.1} parent=47 // pred_check
          %p366 = pneg %p137
        $region66: #{tpu_custom_call.1} parent=47 // pred_check_branch
          %368 = sbr.rel (%p366) target = $region68
        $region67: #{tpu_custom_call.1} parent=47 // pred_region
          %369 = dma.done [#allocation9], 16
        $region68: #{tpu_custom_call.1} parent=47 // pred_fallthru
          _
        // Predicated region
        $region69: #{tpu_custom_call.1} parent=47 // pred_check
          %p370 = pneg %p158
        $region70: #{tpu_custom_call.1} parent=47 // pred_check_branch
          %372 = sbr.rel (%p370) target = $region72
        $region71: #{tpu_custom_call.1} parent=47 // pred_region
          %373 = dma.done [#allocation12], 512
        $region72: #{tpu_custom_call.1} parent=47 // pred_fallthru
          _
        // Predicated region
        $region73: #{tpu_custom_call.1} parent=47 // pred_check
          %p374 = pneg %p179
        $region74: #{tpu_custom_call.1} parent=47 // pred_check_branch
          %376 = sbr.rel (%p374) target = $region76
        $region75: #{tpu_custom_call.1} parent=47 // pred_region
          %377 = dma.done [#allocation12], 16
        $region76: #{tpu_custom_call.1} parent=47 // pred_fallthru
          _
        %s378 = sand.u32 %s40, 1
        %s379 = scalar_lea.sflag [#allocation3], %s378
        %s380 = sand.u32 %s40, 1
        %s381 = smul.addr %s380, 8
        %s382 = scalar_lea.vmem [#allocation2], %s381
        %p383 = pneg %p53
        %p384 = pneg %p50
        %p385 = pneg %p74
        %p386 = pneg %p71
        %p387 = pneg %p95
        %p388 = pneg %p92
        %p389 = pneg %p116
        %p390 = pneg %p113
        %p391 = pneg %p137
        %p392 = pneg %p134
        %p393 = pneg %p158
        %p394 = pneg %p155
        %p395 = pneg %p179
        %p396 = pneg %p176
        %p397 = pneg %p205
        %p398 = pneg %p202
        %s399 = sand.u32 %s192, 1
        %s400 = scalar_lea.sflag [#allocation4], %s399
        %s401 = sand.u32 %s192, 1
        %s402 = smul.addr %s401, 8
        %s403 = scalar_lea.vmem [#allocation14], %s402
        %p404 = pneg %p231
        %p405 = pneg %p228
        %s406 = sand.u32 %s218, 1
        %s407 = scalar_lea.sflag [#allocation16], %s406
        %s408 = sand.u32 %s218, 1
        %s409 = smul.addr %s408, 8
        %s410 = scalar_lea.vmem [#allocation15], %s409
        %v411 = vld [vmem:[%s349] sm:$0xff]
        %v412 = vld [vmem:[#allocation5] sm:$0xff]
        %v413 = vld [vmem:[#allocation5 + $0x8] sm:$0xff]
        %v414 = vld [vmem:[#allocation5 + $0x10] sm:$0xff]
        %v415 = vld [vmem:[#allocation5 + $0x18] sm:$0xff]
        %v416 = vld [vmem:[#allocation7] sm:$0x1]
        %v418 = vlaneseq
        %v419 = vshrl.u32 %v418, 7
        %v420 = vsub.s32 0, %v419
        %v421 = vrot.slane %v416, %v420
        %vm423 = vcmask 261120
        %v425 = vsel %vm423, %v411, 0
        %427 = vmatprep.subr.mxu0 0.0
        %428 = vmatpush1.msra.mxu0 %v412
        %429 = vmatprep.subr.mxu0 0.0
        %430 = vmatpush1.msra.mxu0 %v413
        %431 = vmatprep.subr.mxu0 0.0
        %432 = vmatpush1.msra.mxu0 %v414
        %433 = vmatprep.subr.mxu0 0.0
        %434 = vmatpush1.msra.mxu0 %v415
        %435 = vmatprep.subr.mxu0 0.0
        %436 = vmatpush1.msra.mxu0 0.0
        %437 = vmatprep.subr.mxu0 0.0
        %438 = vmatpush1.msra.mxu0 0.0
        %439 = vmatprep.subr.mxu0 0.0
        %440 = vmatpush1.msra.mxu0 0.0
        %441 = vmatprep.subr.mxu0 0.0
        %442 = vmatpush1.msra.mxu0 0.0
        %443 = vmatprep.subr.mxu0 0.0
        %444 = vmatpush1.msra.mxu0 0.0
        %445 = vmatprep.subr.mxu0 0.0
        %446 = vmatpush1.msra.mxu0 0.0
        %447 = vmatprep.subr.mxu0 0.0
        %448 = vmatpush1.msra.mxu0 0.0
        %449 = vmatprep.subr.mxu0 0.0
        %450 = vmatpush1.msra.mxu0 0.0
        %451 = vmatprep.subr.mxu0 0.0
        %452 = vmatpush1.msra.mxu0 0.0
        %453 = vmatprep.subr.mxu0 0.0
        %454 = vmatpush1.msra.mxu0 0.0
        %455 = vmatprep.subr.mxu0 0.0
        %456 = vmatpush1.msra.mxu0 0.0
        %457 = vmatprep.subr.mxu0 0.0
        %458 = vmatpush1.msra.mxu0 0.0
        %459 = vmatprep.subr.mxu0 0.0
        %460 = vmatpush1.msra.mxu0 0.0
        %461 = vmatprep.subr.mxu0 0.0
        %462 = vmatpush1.msra.mxu0 0.0
        %463 = vmatprep.subr.mxu0 0.0
        %464 = vmatpush1.msra.mxu0 0.0
        %465 = vmatprep.subr.mxu0 0.0
        %466 = vmatpush1.msra.mxu0 0.0
        %467 = vmatprep.subr.mxu0 0.0
        %468 = vmatpush1.msra.mxu0 0.0
        %469 = vmatprep.subr.mxu0 0.0
        %470 = vmatpush1.msra.mxu0 0.0
        %471 = vmatprep.subr.mxu0 0.0
        %472 = vmatpush1.msra.mxu0 0.0
        %473 = vmatprep.subr.mxu0 0.0
        %474 = vmatpush1.msra.mxu0 0.0
        %475 = vmatprep.subr.mxu0 0.0
        %476 = vmatpush1.msra.mxu0 0.0
        %477 = vmatprep.subr.mxu0 0.0
        %478 = vmatpush1.msra.mxu0 0.0
        %479 = vmatprep.subr.mxu0 0.0
        %480 = vmatpush1.msra.mxu0 0.0
        %481 = vmatprep.subr.mxu0 0.0
        %482 = vmatpush1.msra.mxu0 0.0
        %483 = vmatprep.subr.mxu0 0.0
        %484 = vmatpush1.msra.mxu0 0.0
        %485 = vmatprep.subr.mxu0 0.0
        %486 = vmatpush1.msra.mxu0 0.0
        %487 = vmatprep.subr.mxu0 0.0
        %488 = vmatpush1.msra.mxu0 0.0
        %489 = vmatprep.subr.mxu0 0.0
        %490 = vmatpush1.msra.mxu0 0.0
        %491 = vmatprep.mubr.f32.mxu0 0.0
        %492 = vmatmul.mubr.f32.gmra.mrb[0].mxu0 %v425
        %v493 = vpop.f32.mrb[0].mxu0
        %v494 = vadd.f32 %v421, %v493
        %v495 = vpop.f32.mrb[0].mxu0
        %496 = vdwg.mxu0
        %v497 = vmax.f32 %v494, 0.0
        %v498 = vsel %vm423, %v497, 0.0
        %499 = vadd.xlane.f32.xlu0 %v498
        %v500 = vpop.xlane.xlu0 %499
        %v501 = vrcp.pop 32.0
        %v502 = vmul.f32 %v500, %v501
        %v503 = vsub.f32 %v497, %v502
        %v504 = vmul.f32 %v503, %v503
        %v505 = vsel %vm423, %v504, 0.0
        %506 = vadd.xlane.f32.xlu0 %v505
        %v507 = vpop.xlane.xlu0 %506
        %v508 = vmul.f32 %v507, %v501
        %v509 = vadd.f32 %v508, 1e-05
        %v510 = vrsqrt.pop %v509
        %v511 = vmul.f32 %v503, %v510
        %v512 = vld [vmem:[#allocation8] sm:$0x1]
        %v514 = vlaneseq
        %v515 = vshrl.u32 %v514, 7
        %v516 = vsub.s32 0, %v515
        %v517 = vrot.slane %v512, %v516
        %v519 = vmul.f32 %v511, %v517
        %v520 = vld [vmem:[#allocation10] sm:$0x1]
        %v522 = vlaneseq
        %v523 = vshrl.u32 %v522, 7
        %v524 = vsub.s32 0, %v523
        %v525 = vrot.slane %v520, %v524
        %v527 = vadd.f32 %v519, %v525
        %528 = vst.msk [vmem:[%s403] sm:$0xff] %vm423, %v527
        %v529 = vld [vmem:[#allocation11] sm:$0xff]
        %v530 = vld [vmem:[#allocation11 + $0x8] sm:$0xff]
        %v531 = vld [vmem:[#allocation11 + $0x10] sm:$0xff]
        %v532 = vld [vmem:[#allocation11 + $0x18] sm:$0xff]
        %v533 = vld [vmem:[#allocation13] sm:$0x1]
        %v535 = vlaneseq
        %v536 = vshrl.u32 %v535, 7
        %v537 = vsub.s32 0, %v536
        %v538 = vrot.slane %v533, %v537
        %v541 = vsel %vm423, %v527, 0
        %543 = vmatprep.subr.mxu0 0.0
        %544 = vmatpush1.msra.mxu0 %v529
        %545 = vmatprep.subr.mxu0 0.0
        %546 = vmatpush1.msra.mxu0 %v530
        %547 = vmatprep.subr.mxu0 0.0
        %548 = vmatpush1.msra.mxu0 %v531
        %549 = vmatprep.subr.mxu0 0.0
        %550 = vmatpush1.msra.mxu0 %v532
        %551 = vmatprep.subr.mxu0 0.0
        %552 = vmatpush1.msra.mxu0 0.0
        %553 = vmatprep.subr.mxu0 0.0
        %554 = vmatpush1.msra.mxu0 0.0
        %555 = vmatprep.subr.mxu0 0.0
        %556 = vmatpush1.msra.mxu0 0.0
        %557 = vmatprep.subr.mxu0 0.0
        %558 = vmatpush1.msra.mxu0 0.0
        %559 = vmatprep.subr.mxu0 0.0
        %560 = vmatpush1.msra.mxu0 0.0
        %561 = vmatprep.subr.mxu0 0.0
        %562 = vmatpush1.msra.mxu0 0.0
        %563 = vmatprep.subr.mxu0 0.0
        %564 = vmatpush1.msra.mxu0 0.0
        %565 = vmatprep.subr.mxu0 0.0
        %566 = vmatpush1.msra.mxu0 0.0
        %567 = vmatprep.subr.mxu0 0.0
        %568 = vmatpush1.msra.mxu0 0.0
        %569 = vmatprep.subr.mxu0 0.0
        %570 = vmatpush1.msra.mxu0 0.0
        %571 = vmatprep.subr.mxu0 0.0
        %572 = vmatpush1.msra.mxu0 0.0
        %573 = vmatprep.subr.mxu0 0.0
        %574 = vmatpush1.msra.mxu0 0.0
        %575 = vmatprep.subr.mxu0 0.0
        %576 = vmatpush1.msra.mxu0 0.0
        %577 = vmatprep.subr.mxu0 0.0
        %578 = vmatpush1.msra.mxu0 0.0
        %579 = vmatprep.subr.mxu0 0.0
        %580 = vmatpush1.msra.mxu0 0.0
        %581 = vmatprep.subr.mxu0 0.0
        %582 = vmatpush1.msra.mxu0 0.0
        %583 = vmatprep.subr.mxu0 0.0
        %584 = vmatpush1.msra.mxu0 0.0
        %585 = vmatprep.subr.mxu0 0.0
        %586 = vmatpush1.msra.mxu0 0.0
        %587 = vmatprep.subr.mxu0 0.0
        %588 = vmatpush1.msra.mxu0 0.0
        %589 = vmatprep.subr.mxu0 0.0
        %590 = vmatpush1.msra.mxu0 0.0
        %591 = vmatprep.subr.mxu0 0.0
        %592 = vmatpush1.msra.mxu0 0.0
        %593 = vmatprep.subr.mxu0 0.0
        %594 = vmatpush1.msra.mxu0 0.0
        %595 = vmatprep.subr.mxu0 0.0
        %596 = vmatpush1.msra.mxu0 0.0
        %597 = vmatprep.subr.mxu0 0.0
        %598 = vmatpush1.msra.mxu0 0.0
        %599 = vmatprep.subr.mxu0 0.0
        %600 = vmatpush1.msra.mxu0 0.0
        %601 = vmatprep.subr.mxu0 0.0
        %602 = vmatpush1.msra.mxu0 0.0
        %603 = vmatprep.subr.mxu0 0.0
        %604 = vmatpush1.msra.mxu0 0.0
        %605 = vmatprep.subr.mxu0 0.0
        %606 = vmatpush1.msra.mxu0 0.0
        %607 = vmatprep.mubr.f32.mxu0 0.0
        %608 = vmatmul.mubr.f32.gmra.mrb[0].mxu0 %v541
        %v609 = vpop.f32.mrb[0].mxu0
        %v610 = vadd.f32 %v538, %v609
        %v611 = vpop.f32.mrb[0].mxu0
        %612 = vdwg.mxu0
        %v613 = vlaneseq
        %v614 = vand.u32 %v613, 127
        %vm615 = vcmp.eq.s32.totalorder %v614, 1
        %v616 = vsel %vm615, 0.5, 1.0
        %v617 = vsel %vm615, 0.5, 0.0
        %v618 = vmul.f32 %v610, %v616
        %v619 = vtanh.pop %v618
        %v620 = vmul.f32 %v616, %v619
        %v621 = vadd.f32 %v617, %v620
        %vm622 = vcmask 64512
        %623 = vst.msk [vmem:[%s410] sm:$0xff] %vm622, %v621
        %s624 = sand.u32 %s192, 1
        %s625 = scalar_lea.sflag [#allocation4], %s624
        %s626 = sand.u32 %s192, 1
        %s627 = smul.addr %s626, 8
        %s628 = scalar_lea.vmem [#allocation14], %s627
        %s629 = sand.u32 %s218, 1
        %s630 = scalar_lea.sflag [#allocation16], %s629
        %s631 = sand.u32 %s218, 1
        %s632 = smul.addr %s631, 8
        %s633 = scalar_lea.vmem [#allocation15], %s632
        // Predicated region
        $region77: #{tpu_custom_call.1} parent=47 // pred_check
          %p634 = pneg %p202
        $region78: #{tpu_custom_call.1} parent=47 // pred_check_branch
          %636 = sbr.rel (%p634) target = $region80
        $region79: #{tpu_custom_call.1} parent=47 // pred_region
          %s638 = ssub.s32 128, 128
          %639 = vsyncadd %s625, %s638
          %s640 = smul.addr %s32, 128
          %s641 = scalar_lea.hbm %s7, %s640
          %s643 = sshll.u32 %s628, 4
          %s644 = int_to_ptr.vmem [resolvable:$true] %s643
          %646 = dma.vmem_to_hbm [thread:$0]  %s644, 128, %s641, %s625
        $region80: #{tpu_custom_call.1} parent=47 // pred_fallthru
          _
        // Predicated region
        $region81: #{tpu_custom_call.1} parent=47 // pred_check
          %p647 = pneg %p228
        $region82: #{tpu_custom_call.1} parent=47 // pred_check_branch
          %649 = sbr.rel (%p647) target = $region84
        $region83: #{tpu_custom_call.1} parent=47 // pred_region
          %s651 = ssub.s32 128, 128
          %652 = vsyncadd %s630, %s651
          %s653 = smul.addr %s32, 128
          %s654 = scalar_lea.hbm %s8, %s653
          %s656 = sshll.u32 %s633, 4
          %s657 = int_to_ptr.vmem [resolvable:$true] %s656
          %659 = dma.vmem_to_hbm [thread:$0]  %s657, 128, %s654, %s630
        $region84: #{tpu_custom_call.1} parent=47 // pred_fallthru
          _
      $region48: #{tpu_custom_call.1} parent=5 // pred_fallthru
        _
      %p660 = scmp.le.s32.totalorder 2, %s27
      // Predicated region
      $region85: #{tpu_custom_call.1} parent=5 // pred_check
        %p661 = pneg %p660
      $region86: #{tpu_custom_call.1} parent=5 // pred_check_branch
        %663 = sbr.rel (%p661) target = $region88
      $region87: #{tpu_custom_call.1} parent=5 // pred_region
        %s664 = ssub.s32 %s27, 2
        // Predicated region
        $region89: #{tpu_custom_call.1} parent=87 // pred_check
          %p665 = pneg %p208
        $region90: #{tpu_custom_call.1} parent=87 // pred_check_branch
          %667 = sbr.rel (%p665) target = $region92
        $region91: #{tpu_custom_call.1} parent=87 // pred_region
          %s668 = sand.u32 %s193, 1
          %s669 = scalar_lea.sflag [#allocation4], %s668
          %s670 = sand.u32 %s193, 1
          %s671 = smul.addr %s670, 8
          %s672 = scalar_lea.vmem [#allocation14], %s671
          %673 = dma.done %s669, 128
        $region92: #{tpu_custom_call.1} parent=87 // pred_fallthru
          _
        // Predicated region
        $region93: #{tpu_custom_call.1} parent=87 // pred_check
          %p674 = pneg %p234
        $region94: #{tpu_custom_call.1} parent=87 // pred_check_branch
          %676 = sbr.rel (%p674) target = $region96
        $region95: #{tpu_custom_call.1} parent=87 // pred_region
          %s677 = sand.u32 %s219, 1
          %s678 = scalar_lea.sflag [#allocation16], %s677
          %s679 = sand.u32 %s219, 1
          %s680 = smul.addr %s679, 8
          %s681 = scalar_lea.vmem [#allocation15], %s680
          %682 = dma.done %s678, 128
        $region96: #{tpu_custom_call.1} parent=87 // pred_fallthru
          _
      $region88: #{tpu_custom_call.1} parent=5 // pred_fallthru
        _
    $region6: #{tpu_custom_call.1} parent=1 // loop_footer
      %s31 = sadd.s32 1, %s27
    $region7: #{tpu_custom_call.1} parent=1 // loop_footer_branch
      %26 = sbr.rel target = $region3
    $region8: #{tpu_custom_call.1} parent=1 // loop_exit
      _
    %683 = vsyncpa [#allocation3], 1
    %s684 = scalar_lea.sflag [#allocation3], 1
    %685 = vsyncpa %s684, 1
    %686 = vsyncpa [#allocation6], 1
    %687 = vsyncpa [#allocation9], 1
    %688 = vsyncpa [#allocation12], 1
    %689 = vsyncpa [#allocation4], 1
    %s690 = scalar_lea.sflag [#allocation4], 1
    %691 = vsyncpa %s690, 1
    %692 = vsyncpa [#allocation16], 1
    %s693 = scalar_lea.sflag [#allocation16], 1
    %694 = vsyncpa %s693, 1

</llo_original>
